<compile_context>
chip_gen: v7x
topology: tpu7x:2x2x1
jax: 0.10.0
libtpu: 0.0.40
codegen_flags: <defaults>
</compile_context>

<pallas_src>
import jax
import jax.numpy as jnp
from jax.experimental import pallas as pl
from jax.experimental.pallas import tpu as pltpu

NUM_BOND_TYPE = 6
NUM_BOND_DIRECTION = 3

TARGET_ROWS_PER_TILE = 1024   # MXU M-rows per grid step for real workloads
MIN_TILES = 2                 # keep >=2 grid steps so v7x's 2 TensorCores both get work


def _round_up(v: int, m: int) -> int:
    return (v + m - 1) // m * m


def gnn_decoder_kernel(alpha_ref,                       # SMEM (1,) f32: PReLU parameter
                       sp_ref, sm_ref, eagg_ref,        # [R, D] bf16 each
                       wenc_ref, w1_ref, b1_ref, w2_ref, b2_ref,
                       out_ref):                        # [R, O] f32
    alpha = alpha_ref[0]

    # A @ PReLU(x) = S_plus - alpha * S_minus  (segment sums precomputed in the wrapper,
    # self loops included).  f32 elementwise on the VPU.
    p = sp_ref[...].astype(jnp.float32) - alpha * sm_ref[...].astype(jnp.float32)

    # enc_to_dec (Linear, no bias) pulled through the linear aggregation:
    #   (A @ PReLU(x)) @ W_enc == A @ (PReLU(x) @ W_enc);  F.dropout(p=0.0) is identity.
    agg = jnp.dot(p.astype(jnp.bfloat16), wenc_ref[...],
                  preferred_element_type=jnp.float32)                      # [R, D] f32
    agg = agg + eagg_ref[...].astype(jnp.float32)                          # + edge-attr aggregate

    # GINConv.mlp : Linear -> ReLU -> Linear  (bf16 MXU operands, f32 accumulation)
    z = jnp.dot(agg.astype(jnp.bfloat16), w1_ref[...],
                preferred_element_type=jnp.float32) + b1_ref[...]          # [R, H]
    z = jnp.maximum(z, 0.0)
    out_ref[...] = jnp.dot(z.astype(jnp.bfloat16), w2_ref[...],
                           preferred_element_type=jnp.float32) + b2_ref[...]


def gnn_decoder_forward(node_attr, edge_index, edge_type, edge_dire_type, params,
                        target_rows_per_tile=TARGET_ROWS_PER_TILE, min_tiles=MIN_TILES):
    """Batched forward.  node_attr: [B,N,D] f32, edge_index: [B,2,E] (equal-sized graphs)."""
    B, N, D = node_attr.shape
    E = edge_index.shape[2]
    H = params["w1"].shape[1]
    O = params["w2"].shape[1]

    x = node_attr.astype(jnp.float32)
    src = edge_index[:, 0, :]                                              # [B, E]
    tgt = edge_index[:, 1, :]                                              # [B, E]
    b_idx = jnp.repeat(jnp.arange(B, dtype=jnp.int32), E)                  # [B*E]
    tgt_flat = tgt.reshape(-1)

    # ---- JAX glue (data-dependent gather/scatter stays outside the kernel) -------------
    # Edge-attribute aggregate per target node + one self-loop attr (type 4, direction 0).
    edge_attr = (jnp.take(params["emb01"], edge_type, axis=0)
                 + jnp.take(params["emb02"], edge_dire_type, axis=0))      # [B, E, D]
    self_loop_attr = params["emb01"][4] + params["emb02"][0]               # [D]
    eagg = jnp.zeros((B, N, D), jnp.float32).at[b_idx, tgt_flat].add(
        edge_attr.reshape(B * E, D))
    eagg = eagg + self_loop_attr[None, None, :]                            # [B, N, D]

    # Neighbor segment-sums of relu(+/-x) (incl. self loops) so the kernel can form
    # A @ PReLU(x) = S_plus - alpha * S_minus without any [R, R] adjacency matmul.
    def seg_sum(v):                                                        # v: [B, N, D]
        msgs = jnp.take_along_axis(v, src[:, :, None], axis=1)             # [B, E, D]
        out = jnp.zeros((B, N, D), jnp.float32).at[b_idx, tgt_flat].add(
            msgs.reshape(B * E, D))
        return out + v                                                     # + self loop

    s_plus = seg_sum(jnp.maximum(x, 0.0))
    s_minus = seg_sum(jnp.maximum(-x, 0.0))

    # ---- row tiling: kernel is purely row-wise, so flatten & pad to a multiple of R -----
    total = B * N
    r = max(1, -(-total // min_tiles))                                     # ceil(total/min_tiles)
    R = max(8, min(_round_up(target_rows_per_tile, 8), _round_up(r, 8)))
    padded = _round_up(total, R)
    T = padded // R
    pad = padded - total

    def prep(a, dtype):                                                    # [B,N,D] -> [padded,D]
        a = a.reshape(total, -1).astype(dtype)
        return jnp.pad(a, ((0, pad), (0, 0))) if pad else a

    sp = prep(s_plus, jnp.bfloat16)
    sm = prep(s_minus, jnp.bfloat16)
    eg = prep(eagg, jnp.bfloat16)

    # ---- Pallas call ---------------------------------------------------------------------
    row_map = lambda t: (t, 0)
    const_map = lambda t: (0, 0)
    in_specs = [
        pl.BlockSpec(memory_space=pltpu.MemorySpace.SMEM),   # alpha -> scalar path (SMEM)
        pl.BlockSpec((R, D), row_map),                       # S_plus
        pl.BlockSpec((R, D), row_map),                       # S_minus
        pl.BlockSpec((R, D), row_map),                       # edge-attr aggregate
        pl.BlockSpec((D, D), const_map),                     # w_enc
        pl.BlockSpec((D, H), const_map),                     # w1
        pl.BlockSpec((1, H), const_map),                     # b1
        pl.BlockSpec((H, O), const_map),                     # w2
        pl.BlockSpec((1, O), const_map),                     # b2
    ]
    out_specs = pl.BlockSpec((R, O), row_map)

    cost = pl.CostEstimate(
        flops=2 * padded * (D * D + D * H + H * O),
        transcendentals=0,
        bytes_accessed=(3 * padded * D * 2 + padded * O * 4
                        + (D * D + D * H + H * O) * 2 + (H + O) * 4 + 4),
    )

    out = pl.pallas_call(
        gnn_decoder_kernel,
        out_shape=jax.ShapeDtypeStruct((padded, O), jnp.float32),
        grid=(T,),
        in_specs=in_specs,
        out_specs=out_specs,
        compiler_params=pltpu.CompilerParams(
            dimension_semantics=("parallel",),               # megacore / v7x 2-TC sharding
            vmem_limit_bytes=32 * 1024 * 1024,               # headroom for big tiles on v5e
        ),
        cost_estimate=cost,
    )(
        params["alpha"].astype(jnp.float32).reshape(1),      # (1,) f32 in SMEM
        sp, sm, eg,
        params["w_enc"].astype(jnp.bfloat16),
        params["w1"].astype(jnp.bfloat16),
        params["b1"].reshape(1, H).astype(jnp.float32),
        params["w2"].astype(jnp.bfloat16),
        params["b2"].reshape(1, O).astype(jnp.float32),
    )
    # TODO(synk): if a bundle dump ever shows masked vst on the critical path, present a
    # lane-dense [padded*O/128, 128] output slab instead of [padded, O] (measure first).
    return out[:total].reshape(B, N, O)


def reference_forward(node_attr, edge_index, edge_type, edge_dire_type, params):
    """Pure-JAX f32 reference of the PyTorch forward (per-graph, vmapped)."""
    B, N, D = node_attr.shape
    a = params["alpha"][0]
    h = jnp.where(node_attr >= 0, node_attr, a * node_attr)               # PReLU
    h = h @ params["w_enc"]                                               # enc_to_dec (no bias)
    edge_attr = params["emb01"][edge_type] + params["emb02"][edge_dire_type]  # [B, E, D]
    self_loop = params["emb01"][4] + params["emb02"][0]                   # [D]

    def one(hb, srcb, tgtb, eab):
        msgs = hb[srcb] + eab                                             # [E, D]
        agg = jnp.zeros((N, D), jnp.float32).at[tgtb].add(msgs)
        agg = agg + hb + self_loop[None, :]                               # self loops
        z = jnp.maximum(agg @ params["w1"] + params["b1"], 0.0)
        return z @ params["w2"] + params["b2"]

    return jax.vmap(one)(h, edge_index[:, 0, :], edge_index[:, 1, :], edge_attr)


if __name__ == "__main__":
    # Small synthetic shapes consistent with the module (in_dim, hidden_dim, out_dim).
    # total rows = 256 -> two 128-row tiles (T=2, one per v7x TensorCore); larger batches
    # automatically grow to 1024-row tiles.
    B, N, E = 32, 8, 12
    IN_DIM, HID_DIM, OUT_DIM = 32, 64, 32

    key = jax.random.PRNGKey(0)
    ks = jax.random.split(key, 12)

    node_attr = jax.random.normal(ks[0], (B, N, IN_DIM), jnp.float32)
    edge_index = jax.random.randint(ks[1], (B, 2, E), 0, N, dtype=jnp.int32)
    edge_type = jax.random.randint(ks[2], (B, E), 0, NUM_BOND_TYPE, dtype=jnp.int32)
    edge_dire_type = jax.random.randint(ks[3], (B, E), 0, NUM_BOND_DIRECTION, dtype=jnp.int32)

    # Deterministic synthetic parameters (shapes from __init__); kept f32 in the wrapper,
    # cast to bf16 for the MXU at the pallas_call boundary.
    params = {
        "alpha": jnp.array([0.25], jnp.float32),                                  # PReLU init
        "w_enc": 0.1 * jax.random.normal(ks[4], (IN_DIM, IN_DIM), jnp.float32),   # enc_to_dec
        "emb01": 0.1 * jax.random.normal(ks[5], (NUM_BOND_TYPE, IN_DIM), jnp.float32),
        "emb02": 0.1 * jax.random.normal(ks[6], (NUM_BOND_DIRECTION, IN_DIM), jnp.float32),
        "w1": 0.1 * jax.random.normal(ks[7], (IN_DIM, HID_DIM), jnp.float32),     # mlp Linear 1
        "b1": 0.1 * jax.random.normal(ks[9], (HID_DIM,), jnp.float32),
        "w2": 0.1 * jax.random.normal(ks[8], (HID_DIM, OUT_DIM), jnp.float32),    # mlp Linear 2
        "b2": 0.1 * jax.random.normal(ks[10], (OUT_DIM,), jnp.float32),
    }

    out = gnn_decoder_forward(node_attr, edge_index, edge_type, edge_dire_type, params)
    out = jax.block_until_ready(out)

    ref = reference_forward(node_attr, edge_index, edge_type, edge_dire_type, params)
    assert out.shape == (B, N, OUT_DIM)
    # bf16 MXU operands + bf16-shipped segment sums vs a pure-f32 reference -> relaxed tol.
    err = float(jnp.max(jnp.abs(out - ref)))
    assert jnp.allclose(out, ref, atol=5e-2, rtol=5e-2), f"max abs err = {err}"

    print("KERNEL_OK")
</pallas_src>

<mosaic_0001>
module attributes {stable_mosaic.version = 11 : i64} {
  func.func @gnn_decoder_kernel(%arg0: i32, %arg1: memref<1xf32, #tpu.memory_space<smem>>, %arg2: memref<128x32xbf16, #tpu.memory_space<vmem>>, %arg3: memref<128x32xbf16, #tpu.memory_space<vmem>>, %arg4: memref<128x32xbf16, #tpu.memory_space<vmem>>, %arg5: memref<32x32xbf16, #tpu.memory_space<vmem>>, %arg6: memref<32x64xbf16, #tpu.memory_space<vmem>>, %arg7: memref<1x64xf32, #tpu.memory_space<vmem>>, %arg8: memref<64x32xbf16, #tpu.memory_space<vmem>>, %arg9: memref<1x32xf32, #tpu.memory_space<vmem>>, %arg10: memref<128x32xf32, #tpu.memory_space<vmem>>) attributes {dimension_semantics = [#tpu.dimension_semantics<parallel>], iteration_bounds = array<i64: 2>, scalar_prefetch = 0 : i64, scratch_operands = 0 : i64, tpu.core_type = #tpu.core_type<tc>, window_params = [{transform_indices = @transform_0, window_bounds = array<i64: 1>}, {transform_indices = @transform_1, window_bounds = array<i64: 128, 32>}, {transform_indices = @transform_2, window_bounds = array<i64: 128, 32>}, {transform_indices = @transform_3, window_bounds = array<i64: 128, 32>}, {pipeline_mode = #tpu.pipeline_mode<synchronous>, transform_indices = @transform_4, window_bounds = array<i64: 32, 32>}, {pipeline_mode = #tpu.pipeline_mode<synchronous>, transform_indices = @transform_5, window_bounds = array<i64: 32, 64>}, {pipeline_mode = #tpu.pipeline_mode<synchronous>, transform_indices = @transform_6, window_bounds = array<i64: 1, 64>}, {pipeline_mode = #tpu.pipeline_mode<synchronous>, transform_indices = @transform_7, window_bounds = array<i64: 64, 32>}, {pipeline_mode = #tpu.pipeline_mode<synchronous>, transform_indices = @transform_8, window_bounds = array<i64: 1, 32>}, {transform_indices = @transform_9, window_bounds = array<i64: 128, 32>}]} {
    %c0 = arith.constant 0 : index
    %0 = memref.load %arg1[%c0] : memref<1xf32, #tpu.memory_space<smem>>
    %c0_0 = arith.constant 0 : index
    %c0_1 = arith.constant 0 : index
    %1 = vector.load %arg2[%c0_0, %c0_1] : memref<128x32xbf16, #tpu.memory_space<vmem>>, vector<128x32xbf16>
    %2 = arith.extf %1 : vector<128x32xbf16> to vector<128x32xf32>
    %c0_2 = arith.constant 0 : index
    %c0_3 = arith.constant 0 : index
    %3 = vector.load %arg3[%c0_2, %c0_3] : memref<128x32xbf16, #tpu.memory_space<vmem>>, vector<128x32xbf16>
    %4 = arith.extf %3 : vector<128x32xbf16> to vector<128x32xf32>
    %5 = vector.broadcast %0 : f32 to vector<128x32xf32>
    %6 = arith.mulf %5, %4 : vector<128x32xf32>
    %7 = arith.subf %2, %6 : vector<128x32xf32>
    %8 = arith.truncf %7 : vector<128x32xf32> to vector<128x32xbf16>
    %c0_4 = arith.constant 0 : index
    %c0_5 = arith.constant 0 : index
    %9 = vector.load %arg5[%c0_4, %c0_5] : memref<32x32xbf16, #tpu.memory_space<vmem>>, vector<32x32xbf16>
    %cst = arith.constant dense<0.000000e+00> : vector<128x32xf32>
    %10 = tpu.matmul %8, %9, %cst {dimension_numbers = #tpu.dot_dimension_numbers<[1], [0], [0], [1], [0, 0, 1, 1], [], []>} : vector<128x32xbf16>, vector<32x32xbf16>, vector<128x32xf32> -> vector<128x32xf32>
    %c0_6 = arith.constant 0 : index
    %c0_7 = arith.constant 0 : index
    %11 = vector.load %arg4[%c0_6, %c0_7] : memref<128x32xbf16, #tpu.memory_space<vmem>>, vector<128x32xbf16>
    %12 = arith.extf %11 : vector<128x32xbf16> to vector<128x32xf32>
    %13 = arith.addf %10, %12 : vector<128x32xf32>
    %14 = arith.truncf %13 : vector<128x32xf32> to vector<128x32xbf16>
    %c0_8 = arith.constant 0 : index
    %c0_9 = arith.constant 0 : index
    %15 = vector.load %arg6[%c0_8, %c0_9] : memref<32x64xbf16, #tpu.memory_space<vmem>>, vector<32x64xbf16>
    %cst_10 = arith.constant dense<0.000000e+00> : vector<128x64xf32>
    %16 = tpu.matmul %14, %15, %cst_10 {dimension_numbers = #tpu.dot_dimension_numbers<[1], [0], [0], [1], [0, 0, 1, 1], [], []>} : vector<128x32xbf16>, vector<32x64xbf16>, vector<128x64xf32> -> vector<128x64xf32>
    %c0_11 = arith.constant 0 : index
    %c0_12 = arith.constant 0 : index
    %17 = vector.load %arg7[%c0_11, %c0_12] : memref<1x64xf32, #tpu.memory_space<vmem>>, vector<1x64xf32>
    %18 = vector.broadcast %17 : vector<1x64xf32> to vector<128x64xf32>
    %19 = arith.addf %16, %18 : vector<128x64xf32>
    %cst_13 = arith.constant 0.000000e+00 : f32
    %20 = vector.broadcast %cst_13 : f32 to vector<128x64xf32>
    %21 = arith.maximumf %19, %20 : vector<128x64xf32>
    %22 = arith.truncf %21 : vector<128x64xf32> to vector<128x64xbf16>
    %c0_14 = arith.constant 0 : index
    %c0_15 = arith.constant 0 : index
    %23 = vector.load %arg8[%c0_14, %c0_15] : memref<64x32xbf16, #tpu.memory_space<vmem>>, vector<64x32xbf16>
    %cst_16 = arith.constant dense<0.000000e+00> : vector<128x32xf32>
    %24 = tpu.matmul %22, %23, %cst_16 {dimension_numbers = #tpu.dot_dimension_numbers<[1], [0], [0], [1], [0, 0, 1, 1], [], []>} : vector<128x64xbf16>, vector<64x32xbf16>, vector<128x32xf32> -> vector<128x32xf32>
    %c0_17 = arith.constant 0 : index
    %c0_18 = arith.constant 0 : index
    %25 = vector.load %arg9[%c0_17, %c0_18] : memref<1x32xf32, #tpu.memory_space<vmem>>, vector<1x32xf32>
    %26 = vector.broadcast %25 : vector<1x32xf32> to vector<128x32xf32>
    %27 = arith.addf %24, %26 : vector<128x32xf32>
    %c0_19 = arith.constant 0 : index
    %c0_20 = arith.constant 0 : index
    %28 = vector.load %arg10[%c0_19, %c0_20] : memref<128x32xf32, #tpu.memory_space<vmem>>, vector<128x32xf32>
    tpu.vector_store %arg10[%c0_19, %c0_20], %27 {strides = array<i32>} : memref<128x32xf32, #tpu.memory_space<vmem>>, vector<128x32xf32>,
    return
  }
  func.func @transform_0(%arg0: i32) -> i32 {
    %c0_i32 = arith.constant 0 : i32
    %c0_i32_0 = arith.constant 0 : i32
    return %c0_i32 : i32
  }
  func.func @transform_1(%arg0: i32) -> (i32, i32) {
    %c0_i32 = arith.constant 0 : i32
    %c0_i32_0 = arith.constant 0 : i32
    return %arg0, %c0_i32 : i32, i32
  }
  func.func @transform_2(%arg0: i32) -> (i32, i32) {
    %c0_i32 = arith.constant 0 : i32
    %c0_i32_0 = arith.constant 0 : i32
    return %arg0, %c0_i32 : i32, i32
  }
  func.func @transform_3(%arg0: i32) -> (i32, i32) {
    %c0_i32 = arith.constant 0 : i32
    %c0_i32_0 = arith.constant 0 : i32
    return %arg0, %c0_i32 : i32, i32
  }
  func.func @transform_4(%arg0: i32) -> (i32, i32) {
    %c0_i32 = arith.constant 0 : i32
    %c0_i32_0 = arith.constant 0 : i32
    %c0_i32_1 = arith.constant 0 : i32
    return %c0_i32, %c0_i32_0 : i32, i32
  }
  func.func @transform_5(%arg0: i32) -> (i32, i32) {
    %c0_i32 = arith.constant 0 : i32
    %c0_i32_0 = arith.constant 0 : i32
    %c0_i32_1 = arith.constant 0 : i32
    return %c0_i32, %c0_i32_0 : i32, i32
  }
  func.func @transform_6(%arg0: i32) -> (i32, i32) {
    %c0_i32 = arith.constant 0 : i32
    %c0_i32_0 = arith.constant 0 : i32
    %c0_i32_1 = arith.constant 0 : i32
    return %c0_i32, %c0_i32_0 : i32, i32
  }
  func.func @transform_7(%arg0: i32) -> (i32, i32) {
    %c0_i32 = arith.constant 0 : i32
    %c0_i32_0 = arith.constant 0 : i32
    %c0_i32_1 = arith.constant 0 : i32
    return %c0_i32, %c0_i32_0 : i32, i32
  }
  func.func @transform_8(%arg0: i32) -> (i32, i32) {
    %c0_i32 = arith.constant 0 : i32
    %c0_i32_0 = arith.constant 0 : i32
    %c0_i32_1 = arith.constant 0 : i32
    return %c0_i32, %c0_i32_0 : i32, i32
  }
  func.func @transform_9(%arg0: i32) -> (i32, i32) {
    %c0_i32 = arith.constant 0 : i32
    %c0_i32_0 = arith.constant 0 : i32
    return %arg0, %c0_i32 : i32, i32
  }
}

</mosaic_0001>

<llo_original>
// kernel: tpu_custom_call.1
$region0: #{tpu_custom_call.1}
  #allocation0 [shape = 'u32[]', space=smem, size = 0x4, offset = 0x4, fixed_abs, tag = 'smem constant byte address 0x4 - core index']
  #allocation1 [shape = 'u32[144,128]{1,0:T(1,128)}', space=vmem, size = 0x12000, scoped, tag = 'internal scratch']
  #allocation2 [shape = 'f32[1]{0:T(128)S(6)}', space=smem, size = 0x200, scoped, tag = 'scoped memory for tpu_custom_call.1']
  %s0 = inlined_call_operand.<no memory space> [shape: f32[1], index: 0, kind: input, shape index: {}]
  %s1 = inlined_call_operand.vmem [shape: bf16[256,32], index: 1, kind: input, shape index: {}]
  %s2 = inlined_call_operand.vmem [shape: bf16[256,32], index: 2, kind: input, shape index: {}]
  %s3 = inlined_call_operand.vmem [shape: bf16[256,32], index: 3, kind: input, shape index: {}]
  %s4 = inlined_call_operand.vmem [shape: bf16[32,32], index: 4, kind: input, shape index: {}]
  %s5 = inlined_call_operand.vmem [shape: bf16[32,64], index: 5, kind: input, shape index: {}]
  %s6 = inlined_call_operand.vmem [shape: f32[1,64], index: 6, kind: input, shape index: {}]
  %s7 = inlined_call_operand.vmem [shape: bf16[64,32], index: 7, kind: input, shape index: {}]
  %s8 = inlined_call_operand.vmem [shape: f32[1,32], index: 8, kind: input, shape index: {}]
  %s9 = inlined_call_operand.vmem [shape: f32[256,32], index: 9, kind: output, shape index: {}]
  %s10 = sld [smem:[#allocation0]]
  $region69: #{tpu_custom_call.1} parent=0
    _
  %s12 = ssub.s32 1, %s10
  %s13 = scalar_select 0, %s12, %s10
  %14 = sst [smem:[#allocation2]] %s0
  loop: start=0, step=1, limit=4
  $region2: #{tpu_custom_call.1} parent=0 // loop_pre_header
    _
  $region3: #{tpu_custom_call.1} parent=0 // loop_header
    %s16 = sphi 0, %s20
    %p17 = scmp.ge.s32.totalorder %s16, 4
    %s24 = sphi 0, %s24
    %s26 = sphi 0, %s24
    %s27 = sphi 0, %s26
    %s41 = sphi 0, %s27
    %s47 = sphi 0, %s49
    %s50 = sphi 0, %s47
    %s51 = sphi 0, %s50
    %s67 = sphi 0, %s51
    %s73 = sphi 0, %s75
    %s76 = sphi 0, %s73
    %s77 = sphi 0, %s76
    %s93 = sphi 0, %s77
    %s99 = sphi 0, %s101
    %s102 = sphi 0, %s99
    %s103 = sphi 0, %s102
    %s119 = sphi 0, %s103
    %s123 = sphi 0, %s123
    %s125 = sphi 0, %s123
    %s126 = sphi 0, %s125
    %s140 = sphi 0, %s126
    %s144 = sphi 0, %s144
    %s146 = sphi 0, %s144
    %s147 = sphi 0, %s146
    %s161 = sphi 0, %s147
    %s165 = sphi 0, %s165
    %s167 = sphi 0, %s165
    %s168 = sphi 0, %s167
    %s182 = sphi 0, %s168
    %s186 = sphi 0, %s186
    %s188 = sphi 0, %s186
    %s189 = sphi 0, %s188
    %s203 = sphi 0, %s189
    %s207 = sphi 0, %s207
    %s209 = sphi 0, %s207
    %s210 = sphi 0, %s209
    %s224 = sphi 0, %s210
    %s230 = sphi 0, %s232
    %s233 = sphi 0, %s230
    %s234 = sphi 0, %s233
    %s250 = sphi 0, %s234
  $region4: #{tpu_custom_call.1} parent=0 // loop_header_branch
    %19 = sbr.rel (%p17) target = $region8
  $region5: #{tpu_custom_call.1} parent=0 // loop_body
    %s21 = ssub.s32 %s16, 1
    %s22 = ssub.s32 %s16, 2
    %s23 = sadd.s32 %s16, 1
    %s25 = sadd.s32 %s24, 1
    %p28 = scmp.eq.s32.totalorder %s16, 1
    %p29 = scmp.ne.s32.totalorder %s24, %s26
    %p30 = scmp.eq.s32.totalorder %s16, 0
    %p31 = por %p29, %p30
    %p32 = scmp.ne.s32.totalorder %s24, %s26
    %p33 = scmp.eq.s32.totalorder %s21, 1
    %p34 = por %p32, %p33
    %p35 = scmp.ne.s32.totalorder %s26, %s27
    %p36 = scmp.eq.s32.totalorder %s21, 0
    %p37 = por %p35, %p36
    %p38 = scmp.ne.s32.totalorder %s26, %s27
    %p39 = scmp.eq.s32.totalorder %s22, 1
    %p40 = por %p38, %p39
    %p42 = scmp.ne.s32.totalorder %s27, %s41
    %p43 = scmp.eq.s32.totalorder %s22, 0
    %p44 = por %p42, %p43
    %s45 = ssub.s32 %s16, %s23
    %p46 = scmp.eq.s32.totalorder %s45, 0
    %s48 = sadd.s32 %s47, 1
    %s49 = scalar_select %p46, %s47, %s48
    %p52 = pneg %p46
    %p53 = scmp.eq.s32.totalorder %s16, 1
    %p54 = por %p52, %p53
    %p55 = scmp.ne.s32.totalorder %s47, %s50
    %p56 = scmp.eq.s32.totalorder %s16, 0
    %p57 = por %p55, %p56
    %p58 = scmp.ne.s32.totalorder %s47, %s50
    %p59 = scmp.eq.s32.totalorder %s21, 1
    %p60 = por %p58, %p59
    %p61 = scmp.ne.s32.totalorder %s50, %s51
    %p62 = scmp.eq.s32.totalorder %s21, 0
    %p63 = por %p61, %p62
    %p64 = scmp.ne.s32.totalorder %s50, %s51
    %p65 = scmp.eq.s32.totalorder %s22, 1
    %p66 = por %p64, %p65
    %p68 = scmp.ne.s32.totalorder %s51, %s67
    %p69 = scmp.eq.s32.totalorder %s22, 0
    %p70 = por %p68, %p69
    %s71 = ssub.s32 %s16, %s23
    %p72 = scmp.eq.s32.totalorder %s71, 0
    %s74 = sadd.s32 %s73, 1
    %s75 = scalar_select %p72, %s73, %s74
    %p78 = pneg %p72
    %p79 = scmp.eq.s32.totalorder %s16, 1
    %p80 = por %p78, %p79
    %p81 = scmp.ne.s32.totalorder %s73, %s76
    %p82 = scmp.eq.s32.totalorder %s16, 0
    %p83 = por %p81, %p82
    %p84 = scmp.ne.s32.totalorder %s73, %s76
    %p85 = scmp.eq.s32.totalorder %s21, 1
    %p86 = por %p84, %p85
    %p87 = scmp.ne.s32.totalorder %s76, %s77
    %p88 = scmp.eq.s32.totalorder %s21, 0
    %p89 = por %p87, %p88
    %p90 = scmp.ne.s32.totalorder %s76, %s77
    %p91 = scmp.eq.s32.totalorder %s22, 1
    %p92 = por %p90, %p91
    %p94 = scmp.ne.s32.totalorder %s77, %s93
    %p95 = scmp.eq.s32.totalorder %s22, 0
    %p96 = por %p94, %p95
    %s97 = ssub.s32 %s16, %s23
    %p98 = scmp.eq.s32.totalorder %s97, 0
    %s100 = sadd.s32 %s99, 1
    %s101 = scalar_select %p98, %s99, %s100
    %p104 = pneg %p98
    %p105 = scmp.eq.s32.totalorder %s16, 1
    %p106 = por %p104, %p105
    %p107 = scmp.ne.s32.totalorder %s99, %s102
    %p108 = scmp.eq.s32.totalorder %s16, 0
    %p109 = por %p107, %p108
    %p110 = scmp.ne.s32.totalorder %s99, %s102
    %p111 = scmp.eq.s32.totalorder %s21, 1
    %p112 = por %p110, %p111
    %p113 = scmp.ne.s32.totalorder %s102, %s103
    %p114 = scmp.eq.s32.totalorder %s21, 0
    %p115 = por %p113, %p114
    %p116 = scmp.ne.s32.totalorder %s102, %s103
    %p117 = scmp.eq.s32.totalorder %s22, 1
    %p118 = por %p116, %p117
    %p120 = scmp.ne.s32.totalorder %s103, %s119
    %p121 = scmp.eq.s32.totalorder %s22, 0
    %p122 = por %p120, %p121
    %s124 = sadd.s32 %s123, 1
    %p127 = scmp.eq.s32.totalorder %s16, 1
    %p128 = scmp.ne.s32.totalorder %s123, %s125
    %p129 = scmp.eq.s32.totalorder %s16, 0
    %p130 = por %p128, %p129
    %p131 = scmp.ne.s32.totalorder %s123, %s125
    %p132 = scmp.eq.s32.totalorder %s21, 1
    %p133 = por %p131, %p132
    %p134 = scmp.ne.s32.totalorder %s125, %s126
    %p135 = scmp.eq.s32.totalorder %s21, 0
    %p136 = por %p134, %p135
    %p137 = scmp.ne.s32.totalorder %s125, %s126
    %p138 = scmp.eq.s32.totalorder %s22, 1
    %p139 = por %p137, %p138
    %p141 = scmp.ne.s32.totalorder %s126, %s140
    %p142 = scmp.eq.s32.totalorder %s22, 0
    %p143 = por %p141, %p142
    %s145 = sadd.s32 %s144, 1
    %p148 = scmp.eq.s32.totalorder %s16, 1
    %p149 = scmp.ne.s32.totalorder %s144, %s146
    %p150 = scmp.eq.s32.totalorder %s16, 0
    %p151 = por %p149, %p150
    %p152 = scmp.ne.s32.totalorder %s144, %s146
    %p153 = scmp.eq.s32.totalorder %s21, 1
    %p154 = por %p152, %p153
    %p155 = scmp.ne.s32.totalorder %s146, %s147
    %p156 = scmp.eq.s32.totalorder %s21, 0
    %p157 = por %p155, %p156
    %p158 = scmp.ne.s32.totalorder %s146, %s147
    %p159 = scmp.eq.s32.totalorder %s22, 1
    %p160 = por %p158, %p159
    %p162 = scmp.ne.s32.totalorder %s147, %s161
    %p163 = scmp.eq.s32.totalorder %s22, 0
    %p164 = por %p162, %p163
    %s166 = sadd.s32 %s165, 1
    %p169 = scmp.eq.s32.totalorder %s16, 1
    %p170 = scmp.ne.s32.totalorder %s165, %s167
    %p171 = scmp.eq.s32.totalorder %s16, 0
    %p172 = por %p170, %p171
    %p173 = scmp.ne.s32.totalorder %s165, %s167
    %p174 = scmp.eq.s32.totalorder %s21, 1
    %p175 = por %p173, %p174
    %p176 = scmp.ne.s32.totalorder %s167, %s168
    %p177 = scmp.eq.s32.totalorder %s21, 0
    %p178 = por %p176, %p177
    %p179 = scmp.ne.s32.totalorder %s167, %s168
    %p180 = scmp.eq.s32.totalorder %s22, 1
    %p181 = por %p179, %p180
    %p183 = scmp.ne.s32.totalorder %s168, %s182
    %p184 = scmp.eq.s32.totalorder %s22, 0
    %p185 = por %p183, %p184
    %s187 = sadd.s32 %s186, 1
    %p190 = scmp.eq.s32.totalorder %s16, 1
    %p191 = scmp.ne.s32.totalorder %s186, %s188
    %p192 = scmp.eq.s32.totalorder %s16, 0
    %p193 = por %p191, %p192
    %p194 = scmp.ne.s32.totalorder %s186, %s188
    %p195 = scmp.eq.s32.totalorder %s21, 1
    %p196 = por %p194, %p195
    %p197 = scmp.ne.s32.totalorder %s188, %s189
    %p198 = scmp.eq.s32.totalorder %s21, 0
    %p199 = por %p197, %p198
    %p200 = scmp.ne.s32.totalorder %s188, %s189
    %p201 = scmp.eq.s32.totalorder %s22, 1
    %p202 = por %p200, %p201
    %p204 = scmp.ne.s32.totalorder %s189, %s203
    %p205 = scmp.eq.s32.totalorder %s22, 0
    %p206 = por %p204, %p205
    %s208 = sadd.s32 %s207, 1
    %p211 = scmp.eq.s32.totalorder %s16, 1
    %p212 = scmp.ne.s32.totalorder %s207, %s209
    %p213 = scmp.eq.s32.totalorder %s16, 0
    %p214 = por %p212, %p213
    %p215 = scmp.ne.s32.totalorder %s207, %s209
    %p216 = scmp.eq.s32.totalorder %s21, 1
    %p217 = por %p215, %p216
    %p218 = scmp.ne.s32.totalorder %s209, %s210
    %p219 = scmp.eq.s32.totalorder %s21, 0
    %p220 = por %p218, %p219
    %p221 = scmp.ne.s32.totalorder %s209, %s210
    %p222 = scmp.eq.s32.totalorder %s22, 1
    %p223 = por %p221, %p222
    %p225 = scmp.ne.s32.totalorder %s210, %s224
    %p226 = scmp.eq.s32.totalorder %s22, 0
    %p227 = por %p225, %p226
    %s228 = ssub.s32 %s16, %s23
    %p229 = scmp.eq.s32.totalorder %s228, 0
    %s231 = sadd.s32 %s230, 1
    %s232 = scalar_select %p229, %s230, %s231
    %p235 = pneg %p229
    %p236 = scmp.eq.s32.totalorder %s16, 1
    %p237 = por %p235, %p236
    %p238 = scmp.ne.s32.totalorder %s230, %s233
    %p239 = scmp.eq.s32.totalorder %s16, 0
    %p240 = por %p238, %p239
    %p241 = scmp.ne.s32.totalorder %s230, %s233
    %p242 = scmp.eq.s32.totalorder %s21, 1
    %p243 = por %p241, %p242
    %p244 = scmp.ne.s32.totalorder %s233, %s234
    %p245 = scmp.eq.s32.totalorder %s21, 0
    %p246 = por %p244, %p245
    %p247 = scmp.ne.s32.totalorder %s233, %s234
    %p248 = scmp.eq.s32.totalorder %s22, 1
    %p249 = por %p247, %p248
    %p251 = scmp.ne.s32.totalorder %s234, %s250
    %p252 = scmp.eq.s32.totalorder %s22, 0
    %p253 = por %p251, %p252
    %p254 = scmp.le.s32.totalorder 1, %s16
    %p255 = scmp.lt.s32.totalorder %s16, 3
    %p256 = pnand %p254, %p255
    %p257 = pneg %p256
    // Predicated region
    $region9: #{tpu_custom_call.1} parent=5 // pred_check
      _
    $region10: #{tpu_custom_call.1} parent=5 // pred_check_branch
      %259 = sbr.rel (%p256) target = $region12
    $region11: #{tpu_custom_call.1} parent=5 // pred_region
      %s260 = ssub.s32 %s16, 1
      // Predicated region
      $region13: #{tpu_custom_call.1} parent=11 // pred_check
        %p261 = pneg %p37
      $region14: #{tpu_custom_call.1} parent=11 // pred_check_branch
        %263 = sbr.rel (%p261) target = $region16
      $region15: #{tpu_custom_call.1} parent=11 // pred_region
        _
      $region16: #{tpu_custom_call.1} parent=11 // pred_fallthru
        _
      // Predicated region
      $region17: #{tpu_custom_call.1} parent=11 // pred_check
        %p264 = pneg %p136
      $region18: #{tpu_custom_call.1} parent=11 // pred_check_branch
        %266 = sbr.rel (%p264) target = $region20
      $region19: #{tpu_custom_call.1} parent=11 // pred_region
        _
      $region20: #{tpu_custom_call.1} parent=11 // pred_fallthru
        _
      // Predicated region
      $region21: #{tpu_custom_call.1} parent=11 // pred_check
        %p267 = pneg %p157
      $region22: #{tpu_custom_call.1} parent=11 // pred_check_branch
        %269 = sbr.rel (%p267) target = $region24
      $region23: #{tpu_custom_call.1} parent=11 // pred_region
        _
      $region24: #{tpu_custom_call.1} parent=11 // pred_fallthru
        _
      // Predicated region
      $region25: #{tpu_custom_call.1} parent=11 // pred_check
        %p270 = pneg %p178
      $region26: #{tpu_custom_call.1} parent=11 // pred_check_branch
        %272 = sbr.rel (%p270) target = $region28
      $region27: #{tpu_custom_call.1} parent=11 // pred_region
        _
      $region28: #{tpu_custom_call.1} parent=11 // pred_fallthru
        _
      // Predicated region
      $region29: #{tpu_custom_call.1} parent=11 // pred_check
        %p273 = pneg %p199
      $region30: #{tpu_custom_call.1} parent=11 // pred_check_branch
        %275 = sbr.rel (%p273) target = $region32
      $region31: #{tpu_custom_call.1} parent=11 // pred_region
        _
      $region32: #{tpu_custom_call.1} parent=11 // pred_fallthru
        _
      // Predicated region
      $region33: #{tpu_custom_call.1} parent=11 // pred_check
        %p276 = pneg %p220
      $region34: #{tpu_custom_call.1} parent=11 // pred_check_branch
        %278 = sbr.rel (%p276) target = $region36
      $region35: #{tpu_custom_call.1} parent=11 // pred_region
        _
      $region36: #{tpu_custom_call.1} parent=11 // pred_fallthru
        _
    $region12: #{tpu_custom_call.1} parent=5 // pred_fallthru
      _
    %p279 = scmp.lt.s32.totalorder %s16, 2
    // Predicated region
    $region37: #{tpu_custom_call.1} parent=5 // pred_check
      %p280 = pneg %p279
    $region38: #{tpu_custom_call.1} parent=5 // pred_check_branch
      %282 = sbr.rel (%p280) target = $region40
    $region39: #{tpu_custom_call.1} parent=5 // pred_region
      // Predicated region
      $region41: #{tpu_custom_call.1} parent=39 // pred_check
        %p283 = pneg %p57
      $region42: #{tpu_custom_call.1} parent=39 // pred_check_branch
        %285 = sbr.rel (%p283) target = $region44
      $region43: #{tpu_custom_call.1} parent=39 // pred_region
        %s286 = smul.u32 16, %s16
        %p287 = scmp.lt.s32.totalorder %s286, 31
        %s288 = scalar_select %p287, %s286, 31
        %s289 = smul.addr %s288, 4
        %s290 = scalar_lea.vmem %s1, %s289
        %s291 = smul.u32 16, %s16
      $region44: #{tpu_custom_call.1} parent=39 // pred_fallthru
        _
      // Predicated region
      $region45: #{tpu_custom_call.1} parent=39 // pred_check
        %p292 = pneg %p83
      $region46: #{tpu_custom_call.1} parent=39 // pred_check_branch
        %294 = sbr.rel (%p292) target = $region48
      $region47: #{tpu_custom_call.1} parent=39 // pred_region
        %s295 = smul.u32 16, %s16
        %p296 = scmp.lt.s32.totalorder %s295, 31
        %s297 = scalar_select %p296, %s295, 31
        %s298 = smul.addr %s297, 4
        %s299 = scalar_lea.vmem %s2, %s298
        %s300 = smul.u32 16, %s16
      $region48: #{tpu_custom_call.1} parent=39 // pred_fallthru
        _
      // Predicated region
      $region49: #{tpu_custom_call.1} parent=39 // pred_check
        %p301 = pneg %p109
      $region50: #{tpu_custom_call.1} parent=39 // pred_check_branch
        %303 = sbr.rel (%p301) target = $region52
      $region51: #{tpu_custom_call.1} parent=39 // pred_region
        %s304 = smul.u32 16, %s16
        %p305 = scmp.lt.s32.totalorder %s304, 31
        %s306 = scalar_select %p305, %s304, 31
        %s307 = smul.addr %s306, 4
        %s308 = scalar_lea.vmem %s3, %s307
        %s309 = smul.u32 16, %s16
      $region52: #{tpu_custom_call.1} parent=39 // pred_fallthru
        _
    $region40: #{tpu_custom_call.1} parent=5 // pred_fallthru
      _
    %p310 = scmp.le.s32.totalorder 1, %s16
    %p311 = scmp.lt.s32.totalorder %s16, 3
    %p312 = pnand %p310, %p311
    %p313 = pneg %p312
    // Predicated region
    $region53: #{tpu_custom_call.1} parent=5 // pred_check
      _
    $region54: #{tpu_custom_call.1} parent=5 // pred_check_branch
      %315 = sbr.rel (%p312) target = $region56
    $region55: #{tpu_custom_call.1} parent=5 // pred_region
      %s316 = ssub.s32 %s16, 1
      %p317 = pneg %p37
      %p318 = pneg %p34
      %s319 = smul.u32 16, %s21
      %p320 = scmp.lt.s32.totalorder %s319, 31
      %s321 = scalar_select %p320, %s319, 31
      %s322 = smul.addr %s321, 4
      %s323 = scalar_lea.vmem %s1, %s322
      %p324 = pneg %p63
      %p325 = pneg %p60
      %s326 = smul.u32 16, %s21
      %p327 = scmp.lt.s32.totalorder %s326, 31
      %s328 = scalar_select %p327, %s326, 31
      %s329 = smul.addr %s328, 4
      %s330 = scalar_lea.vmem %s2, %s329
      %p331 = pneg %p89
      %p332 = pneg %p86
      %s333 = smul.u32 16, %s21
      %p334 = scmp.lt.s32.totalorder %s333, 31
      %s335 = scalar_select %p334, %s333, 31
      %s336 = smul.addr %s335, 4
      %s337 = scalar_lea.vmem %s3, %s336
      %p338 = pneg %p115
      %p339 = pneg %p112
      %p340 = pneg %p136
      %p341 = pneg %p133
      %p342 = pneg %p157
      %p343 = pneg %p154
      %p344 = pneg %p178
      %p345 = pneg %p175
      %p346 = pneg %p199
      %p347 = pneg %p196
      %p348 = pneg %p220
      %p349 = pneg %p217
      %p350 = pneg %p246
      %p351 = pneg %p243
      %s352 = smul.u32 16, %s21
      %p353 = scmp.lt.s32.totalorder %s352, 31
      %s354 = scalar_select %p353, %s352, 31
      %s355 = smul.addr %s354, 8
      %s356 = scalar_lea.vmem %s9, %s355
      %s357 = smul.u32 16, %s21
      %p358 = scmp.lt.s32.totalorder %s357, 31
      %s359 = scalar_select %p358, %s357, 31
      %s360 = smul.addr %s359, 4
      %s361 = scalar_lea.vmem %s1, %s360
      %s362 = smul.u32 16, %s21
      %s363 = smul.u32 16, %s21
      %p364 = scmp.lt.s32.totalorder %s363, 31
      %s365 = scalar_select %p364, %s363, 31
      %s366 = smul.addr %s365, 4
      %s367 = scalar_lea.vmem %s2, %s366
      %s368 = smul.u32 16, %s21
      %s369 = smul.u32 16, %s21
      %p370 = scmp.lt.s32.totalorder %s369, 31
      %s371 = scalar_select %p370, %s369, 31
      %s372 = smul.addr %s371, 4
      %s373 = scalar_lea.vmem %s3, %s372
      %s374 = smul.u32 16, %s21
      %s375 = smul.u32 16, %s21
      %p376 = scmp.lt.s32.totalorder %s375, 31
      %s377 = scalar_select %p376, %s375, 31
      %s378 = smul.addr %s377, 8
      %s379 = scalar_lea.vmem %s9, %s378
      %s380 = smul.u32 16, %s21
      %s382 = sld [smem:[#allocation2]]
      %v383 = vld [vmem:[%s361] sm:$0xf]
      %v384 = vld [vmem:[%s361 + $0x4] sm:$0xf]
      %v385 = vld [vmem:[%s361 + $0x8] sm:$0xf]
      %v386 = vld [vmem:[%s361 + $0xc] sm:$0xf]
      %v387 = vld [vmem:[%s361 + $0x10] sm:$0xf]
      %v388 = vld [vmem:[%s361 + $0x14] sm:$0xf]
      %v389 = vld [vmem:[%s361 + $0x18] sm:$0xf]
      %v390 = vld [vmem:[%s361 + $0x1c] sm:$0xf]
      %v391 = vld [vmem:[%s361 + $0x20] sm:$0xf]
      %v392 = vld [vmem:[%s361 + $0x24] sm:$0xf]
      %v393 = vld [vmem:[%s361 + $0x28] sm:$0xf]
      %v394 = vld [vmem:[%s361 + $0x2c] sm:$0xf]
      %v395 = vld [vmem:[%s361 + $0x30] sm:$0xf]
      %v396 = vld [vmem:[%s361 + $0x34] sm:$0xf]
      %v397 = vld [vmem:[%s361 + $0x38] sm:$0xf]
      %v398 = vld [vmem:[%s361 + $0x3c] sm:$0xf]
      %v399 = vunpack.c.l.bf16 %v383
      %v400 = vunpack.c.l.bf16 %v384
      %v401 = vunpack.c.l.bf16 %v385
      %v402 = vunpack.c.l.bf16 %v386
      %v403 = vunpack.c.l.bf16 %v387
      %v404 = vunpack.c.l.bf16 %v388
      %v405 = vunpack.c.l.bf16 %v389
      %v406 = vunpack.c.l.bf16 %v390
      %v407 = vunpack.c.l.bf16 %v391
      %v408 = vunpack.c.l.bf16 %v392
      %v409 = vunpack.c.l.bf16 %v393
      %v410 = vunpack.c.l.bf16 %v394
      %v411 = vunpack.c.l.bf16 %v395
      %v412 = vunpack.c.l.bf16 %v396
      %v413 = vunpack.c.l.bf16 %v397
      %v414 = vunpack.c.l.bf16 %v398
      %v415 = vld [vmem:[%s367] sm:$0xf]
      %v416 = vld [vmem:[%s367 + $0x4] sm:$0xf]
      %v417 = vld [vmem:[%s367 + $0x8] sm:$0xf]
      %v418 = vld [vmem:[%s367 + $0xc] sm:$0xf]
      %v419 = vld [vmem:[%s367 + $0x10] sm:$0xf]
      %v420 = vld [vmem:[%s367 + $0x14] sm:$0xf]
      %v421 = vld [vmem:[%s367 + $0x18] sm:$0xf]
      %v422 = vld [vmem:[%s367 + $0x1c] sm:$0xf]
      %v423 = vld [vmem:[%s367 + $0x20] sm:$0xf]
      %v424 = vld [vmem:[%s367 + $0x24] sm:$0xf]
      %v425 = vld [vmem:[%s367 + $0x28] sm:$0xf]
      %v426 = vld [vmem:[%s367 + $0x2c] sm:$0xf]
      %v427 = vld [vmem:[%s367 + $0x30] sm:$0xf]
      %v428 = vld [vmem:[%s367 + $0x34] sm:$0xf]
      %v429 = vld [vmem:[%s367 + $0x38] sm:$0xf]
      %v430 = vld [vmem:[%s367 + $0x3c] sm:$0xf]
      %v431 = vunpack.c.l.bf16 %v415
      %v432 = vunpack.c.l.bf16 %v416
      %v433 = vunpack.c.l.bf16 %v417
      %v434 = vunpack.c.l.bf16 %v418
      %v435 = vunpack.c.l.bf16 %v419
      %v436 = vunpack.c.l.bf16 %v420
      %v437 = vunpack.c.l.bf16 %v421
      %v438 = vunpack.c.l.bf16 %v422
      %v439 = vunpack.c.l.bf16 %v423
      %v440 = vunpack.c.l.bf16 %v424
      %v441 = vunpack.c.l.bf16 %v425
      %v442 = vunpack.c.l.bf16 %v426
      %v443 = vunpack.c.l.bf16 %v427
      %v444 = vunpack.c.l.bf16 %v428
      %v445 = vunpack.c.l.bf16 %v429
      %v446 = vunpack.c.l.bf16 %v430
      %v447 = vstv %s382
      %v448 = vmul.f32 %v447, %v431
      %v449 = vmul.f32 %v447, %v432
      %v450 = vmul.f32 %v447, %v433
      %v451 = vmul.f32 %v447, %v434
      %v452 = vmul.f32 %v447, %v435
      %v453 = vmul.f32 %v447, %v436
      %v454 = vmul.f32 %v447, %v437
      %v455 = vmul.f32 %v447, %v438
      %v456 = vmul.f32 %v447, %v439
      %v457 = vmul.f32 %v447, %v440
      %v458 = vmul.f32 %v447, %v441
      %v459 = vmul.f32 %v447, %v442
      %v460 = vmul.f32 %v447, %v443
      %v461 = vmul.f32 %v447, %v444
      %v462 = vmul.f32 %v447, %v445
      %v463 = vmul.f32 %v447, %v446
      %v464 = vsub.f32 %v399, %v448
      %v465 = vsub.f32 %v400, %v449
      %v466 = vsub.f32 %v401, %v450
      %v467 = vsub.f32 %v402, %v451
      %v468 = vsub.f32 %v403, %v452
      %v469 = vsub.f32 %v404, %v453
      %v470 = vsub.f32 %v405, %v454
      %v471 = vsub.f32 %v406, %v455
      %v472 = vsub.f32 %v407, %v456
      %v473 = vsub.f32 %v408, %v457
      %v474 = vsub.f32 %v409, %v458
      %v475 = vsub.f32 %v410, %v459
      %v476 = vsub.f32 %v411, %v460
      %v477 = vsub.f32 %v412, %v461
      %v478 = vsub.f32 %v413, %v462
      %v479 = vsub.f32 %v414, %v463
      %v480 = vpack.c.bf16 %v465, %v464
      %v481 = vpack.c.bf16 %v467, %v466
      %v482 = vpack.c.bf16 %v469, %v468
      %v483 = vpack.c.bf16 %v471, %v470
      %v484 = vpack.c.bf16 %v473, %v472
      %v485 = vpack.c.bf16 %v475, %v474
      %v486 = vpack.c.bf16 %v477, %v476
      %v487 = vpack.c.bf16 %v479, %v478
      %v488 = vld [vmem:[%s4] sm:$0xf]
      %v489 = vld [vmem:[%s4 + $0x4] sm:$0xf]
      %v490 = vld [vmem:[%s4 + $0x8] sm:$0xf]
      %v491 = vld [vmem:[%s4 + $0xc] sm:$0xf]
      %v492 = vld [vmem:[%s373] sm:$0xf]
      %v493 = vld [vmem:[%s373 + $0x4] sm:$0xf]
      %v494 = vld [vmem:[%s373 + $0x8] sm:$0xf]
      %v495 = vld [vmem:[%s373 + $0xc] sm:$0xf]
      %v496 = vld [vmem:[%s373 + $0x10] sm:$0xf]
      %v497 = vld [vmem:[%s373 + $0x14] sm:$0xf]
      %v498 = vld [vmem:[%s373 + $0x18] sm:$0xf]
      %v499 = vld [vmem:[%s373 + $0x1c] sm:$0xf]
      %v500 = vld [vmem:[%s373 + $0x20] sm:$0xf]
      %v501 = vld [vmem:[%s373 + $0x24] sm:$0xf]
      %v502 = vld [vmem:[%s373 + $0x28] sm:$0xf]
      %v503 = vld [vmem:[%s373 + $0x2c] sm:$0xf]
      %v504 = vld [vmem:[%s373 + $0x30] sm:$0xf]
      %v505 = vld [vmem:[%s373 + $0x34] sm:$0xf]
      %v506 = vld [vmem:[%s373 + $0x38] sm:$0xf]
      %v507 = vld [vmem:[%s373 + $0x3c] sm:$0xf]
      %v508 = vunpack.c.l.bf16 %v492
      %v509 = vunpack.c.l.bf16 %v493
      %v510 = vunpack.c.l.bf16 %v494
      %v511 = vunpack.c.l.bf16 %v495
      %v512 = vunpack.c.l.bf16 %v496
      %v513 = vunpack.c.l.bf16 %v497
      %v514 = vunpack.c.l.bf16 %v498
      %v515 = vunpack.c.l.bf16 %v499
      %v516 = vunpack.c.l.bf16 %v500
      %v517 = vunpack.c.l.bf16 %v501
      %v518 = vunpack.c.l.bf16 %v502
      %v519 = vunpack.c.l.bf16 %v503
      %v520 = vunpack.c.l.bf16 %v504
      %v521 = vunpack.c.l.bf16 %v505
      %v522 = vunpack.c.l.bf16 %v506
      %v523 = vunpack.c.l.bf16 %v507
      %v528 = vunpack.c.l.b16 %v488
      %v529 = vunpack.c.l.b16 %v489
      %v530 = vunpack.c.l.b16 %v490
      %v531 = vunpack.c.l.b16 %v491
      %v532 = vpack.c.b16 %v529, %v528
      %v533 = vpack.c.b16 %v531, %v530
      %vm536 = vcmask 261120
      %v538 = vsel %vm536, %v480, 0
      %v541 = vsel %vm536, %v481, 0
      %v544 = vsel %vm536, %v482, 0
      %v547 = vsel %vm536, %v483, 0
      %v550 = vsel %vm536, %v484, 0
      %v553 = vsel %vm536, %v485, 0
      %v556 = vsel %vm536, %v486, 0
      %v559 = vsel %vm536, %v487, 0
      %561 = vmatprep.subr.bf16.mxu0 0
      %562 = vmatpush1.bf16.msra.mxu0 %v532
      %563 = vmatprep.subr.bf16.mxu0 0
      %564 = vmatpush1.bf16.msra.mxu0 %v533
      %565 = vmatprep.subr.bf16.mxu0 0
      %566 = vmatpush1.bf16.msra.mxu0 0
      %567 = vmatprep.subr.bf16.mxu0 0
      %568 = vmatpush1.bf16.msra.mxu0 0
      %569 = vmatprep.subr.bf16.mxu0 0
      %570 = vmatpush1.bf16.msra.mxu0 0
      %571 = vmatprep.subr.bf16.mxu0 0
      %572 = vmatpush1.bf16.msra.mxu0 0
      %573 = vmatprep.subr.bf16.mxu0 0
      %574 = vmatpush1.bf16.msra.mxu0 0
      %575 = vmatprep.subr.bf16.mxu0 0
      %576 = vmatpush1.bf16.msra.mxu0 0
      %577 = vmatprep.subr.bf16.mxu0 0
      %578 = vmatpush1.bf16.msra.mxu0 0
      %579 = vmatprep.subr.bf16.mxu0 0
      %580 = vmatpush1.bf16.msra.mxu0 0
      %581 = vmatprep.subr.bf16.mxu0 0
      %582 = vmatpush1.bf16.msra.mxu0 0
      %583 = vmatprep.subr.bf16.mxu0 0
      %584 = vmatpush1.bf16.msra.mxu0 0
      %585 = vmatprep.subr.bf16.mxu0 0
      %586 = vmatpush1.bf16.msra.mxu0 0
      %587 = vmatprep.subr.bf16.mxu0 0
      %588 = vmatpush1.bf16.msra.mxu0 0
      %589 = vmatprep.subr.bf16.mxu0 0
      %590 = vmatpush1.bf16.msra.mxu0 0
      %591 = vmatprep.subr.bf16.mxu0 0
      %592 = vmatpush1.bf16.msra.mxu0 0
      %593 = vmatprep.mubr.bf16.mxu0 0
      %594 = vmatmul.mubr.bf16.gmra.mrb[0].mxu0 %v538
      %v595 = vpop.f32.mrb[0].mxu0
      %v596 = vadd.f32 %v508, %v595
      %v597 = vpop.f32.mrb[0].mxu0
      %v598 = vpop.f32.mrb[0].mxu0
      %v599 = vadd.f32 %v509, %v598
      %v600 = vpop.f32.mrb[0].mxu0
      %601 = vmatprep.mubr.bf16.mxu0 0
      %602 = vmatmul.mubr.bf16.gmra.mrb[0].mxu0 %v541
      %v603 = vpop.f32.mrb[0].mxu0
      %v604 = vadd.f32 %v510, %v603
      %v605 = vpop.f32.mrb[0].mxu0
      %v606 = vpop.f32.mrb[0].mxu0
      %v607 = vadd.f32 %v511, %v606
      %v608 = vpop.f32.mrb[0].mxu0
      %609 = vmatprep.mubr.bf16.mxu0 0
      %610 = vmatmul.mubr.bf16.gmra.mrb[0].mxu0 %v544
      %v611 = vpop.f32.mrb[0].mxu0
      %v612 = vadd.f32 %v512, %v611
      %v613 = vpop.f32.mrb[0].mxu0
      %v614 = vpop.f32.mrb[0].mxu0
      %v615 = vadd.f32 %v513, %v614
      %v616 = vpop.f32.mrb[0].mxu0
      %617 = vmatprep.mubr.bf16.mxu0 0
      %618 = vmatmul.mubr.bf16.gmra.mrb[0].mxu0 %v547
      %v619 = vpop.f32.mrb[0].mxu0
      %v620 = vadd.f32 %v514, %v619
      %v621 = vpop.f32.mrb[0].mxu0
      %v622 = vpop.f32.mrb[0].mxu0
      %v623 = vadd.f32 %v515, %v622
      %v624 = vpop.f32.mrb[0].mxu0
      %625 = vmatprep.mubr.bf16.mxu0 0
      %626 = vmatmul.mubr.bf16.gmra.mrb[0].mxu0 %v550
      %v627 = vpop.f32.mrb[0].mxu0
      %v628 = vadd.f32 %v516, %v627
      %v629 = vpop.f32.mrb[0].mxu0
      %v630 = vpop.f32.mrb[0].mxu0
      %v631 = vadd.f32 %v517, %v630
      %v632 = vpop.f32.mrb[0].mxu0
      %633 = vmatprep.mubr.bf16.mxu0 0
      %634 = vmatmul.mubr.bf16.gmra.mrb[0].mxu0 %v553
      %v635 = vpop.f32.mrb[0].mxu0
      %v636 = vadd.f32 %v518, %v635
      %v637 = vpop.f32.mrb[0].mxu0
      %v638 = vpop.f32.mrb[0].mxu0
      %v639 = vadd.f32 %v519, %v638
      %v640 = vpop.f32.mrb[0].mxu0
      %641 = vmatprep.mubr.bf16.mxu0 0
      %642 = vmatmul.mubr.bf16.gmra.mrb[0].mxu0 %v556
      %v643 = vpop.f32.mrb[0].mxu0
      %v644 = vadd.f32 %v520, %v643
      %v645 = vpop.f32.mrb[0].mxu0
      %v646 = vpop.f32.mrb[0].mxu0
      %v647 = vadd.f32 %v521, %v646
      %v648 = vpop.f32.mrb[0].mxu0
      %649 = vmatprep.mubr.bf16.mxu0 0
      %650 = vmatmul.mubr.bf16.gmra.mrb[0].mxu0 %v559
      %v651 = vpop.f32.mrb[0].mxu0
      %v652 = vadd.f32 %v522, %v651
      %v653 = vpop.f32.mrb[0].mxu0
      %v654 = vpop.f32.mrb[0].mxu0
      %v655 = vadd.f32 %v523, %v654
      %v656 = vpop.f32.mrb[0].mxu0
      %657 = vdwg.mxu0
      %v658 = vpack.c.bf16 %v599, %v596
      %v659 = vpack.c.bf16 %v607, %v604
      %v660 = vpack.c.bf16 %v615, %v612
      %v661 = vpack.c.bf16 %v623, %v620
      %v662 = vpack.c.bf16 %v631, %v628
      %v663 = vpack.c.bf16 %v639, %v636
      %v664 = vpack.c.bf16 %v647, %v644
      %v665 = vpack.c.bf16 %v655, %v652
      %v666 = vld [vmem:[%s5] sm:$0xf]
      %v667 = vld [vmem:[%s5 + $0x4] sm:$0xf]
      %v668 = vld [vmem:[%s5 + $0x8] sm:$0xf]
      %v669 = vld [vmem:[%s5 + $0xc] sm:$0xf]
      %v670 = vld [vmem:[%s6] sm:$0x1]
      %v672 = vlaneseq
      %v673 = vshrl.u32 %v672, 7
      %v674 = vsub.s32 0, %v673
      %v675 = vrot.slane %v670, %v674
      %v681 = vunpack.c.l.b16 %v666
      %v682 = vunpack.c.l.b16 %v667
      %v683 = vunpack.c.l.b16 %v668
      %v684 = vunpack.c.l.b16 %v669
      %v685 = vpack.c.b16 %v682, %v681
      %v686 = vpack.c.b16 %v684, %v683
      %v690 = vsel %vm536, %v658, 0
      %v693 = vsel %vm536, %v659, 0
      %v696 = vsel %vm536, %v660, 0
      %v699 = vsel %vm536, %v661, 0
      %v702 = vsel %vm536, %v662, 0
      %v705 = vsel %vm536, %v663, 0
      %v708 = vsel %vm536, %v664, 0
      %v711 = vsel %vm536, %v665, 0
      %713 = vmatprep.subr.bf16.mxu0 0
      %714 = vmatpush1.bf16.msra.mxu0 %v685
      %715 = vmatprep.subr.bf16.mxu0 0
      %716 = vmatpush1.bf16.msra.mxu0 %v686
      %717 = vmatprep.subr.bf16.mxu0 0
      %718 = vmatpush1.bf16.msra.mxu0 0
      %719 = vmatprep.subr.bf16.mxu0 0
      %720 = vmatpush1.bf16.msra.mxu0 0
      %721 = vmatprep.subr.bf16.mxu0 0
      %722 = vmatpush1.bf16.msra.mxu0 0
      %723 = vmatprep.subr.bf16.mxu0 0
      %724 = vmatpush1.bf16.msra.mxu0 0
      %725 = vmatprep.subr.bf16.mxu0 0
      %726 = vmatpush1.bf16.msra.mxu0 0
      %727 = vmatprep.subr.bf16.mxu0 0
      %728 = vmatpush1.bf16.msra.mxu0 0
      %729 = vmatprep.subr.bf16.mxu0 0
      %730 = vmatpush1.bf16.msra.mxu0 0
      %731 = vmatprep.subr.bf16.mxu0 0
      %732 = vmatpush1.bf16.msra.mxu0 0
      %733 = vmatprep.subr.bf16.mxu0 0
      %734 = vmatpush1.bf16.msra.mxu0 0
      %735 = vmatprep.subr.bf16.mxu0 0
      %736 = vmatpush1.bf16.msra.mxu0 0
      %737 = vmatprep.subr.bf16.mxu0 0
      %738 = vmatpush1.bf16.msra.mxu0 0
      %739 = vmatprep.subr.bf16.mxu0 0
      %740 = vmatpush1.bf16.msra.mxu0 0
      %741 = vmatprep.subr.bf16.mxu0 0
      %742 = vmatpush1.bf16.msra.mxu0 0
      %743 = vmatprep.subr.bf16.mxu0 0
      %744 = vmatpush1.bf16.msra.mxu0 0
      %745 = vmatprep.mubr.bf16.mxu0 0
      %746 = vmatmul.mubr.bf16.gmra.mrb[0].mxu0 %v690
      %v747 = vpop.f32.mrb[0].mxu0
      %v748 = vadd.f32 %v675, %v747
      %v749 = vpop.f32.mrb[0].mxu0
      %v750 = vpop.f32.mrb[0].mxu0
      %v751 = vadd.f32 %v675, %v750
      %v752 = vpop.f32.mrb[0].mxu0
      %753 = vmatprep.mubr.bf16.mxu0 0
      %754 = vmatmul.mubr.bf16.gmra.mrb[0].mxu0 %v693
      %v755 = vpop.f32.mrb[0].mxu0
      %v756 = vadd.f32 %v675, %v755
      %v757 = vpop.f32.mrb[0].mxu0
      %v758 = vpop.f32.mrb[0].mxu0
      %v759 = vadd.f32 %v675, %v758
      %v760 = vpop.f32.mrb[0].mxu0
      %761 = vmatprep.mubr.bf16.mxu0 0
      %762 = vmatmul.mubr.bf16.gmra.mrb[0].mxu0 %v696
      %v763 = vpop.f32.mrb[0].mxu0
      %v764 = vadd.f32 %v675, %v763
      %v765 = vpop.f32.mrb[0].mxu0
      %v766 = vpop.f32.mrb[0].mxu0
      %v767 = vadd.f32 %v675, %v766
      %v768 = vpop.f32.mrb[0].mxu0
      %769 = vmatprep.mubr.bf16.mxu0 0
      %770 = vmatmul.mubr.bf16.gmra.mrb[0].mxu0 %v699
      %v771 = vpop.f32.mrb[0].mxu0
      %v772 = vadd.f32 %v675, %v771
      %v773 = vpop.f32.mrb[0].mxu0
      %v774 = vpop.f32.mrb[0].mxu0
      %v775 = vadd.f32 %v675, %v774
      %v776 = vpop.f32.mrb[0].mxu0
      %777 = vmatprep.mubr.bf16.mxu0 0
      %778 = vmatmul.mubr.bf16.gmra.mrb[0].mxu0 %v702
      %v779 = vpop.f32.mrb[0].mxu0
      %v780 = vadd.f32 %v675, %v779
      %v781 = vpop.f32.mrb[0].mxu0
      %v782 = vpop.f32.mrb[0].mxu0
      %v783 = vadd.f32 %v675, %v782
      %v784 = vpop.f32.mrb[0].mxu0
      %785 = vmatprep.mubr.bf16.mxu0 0
      %786 = vmatmul.mubr.bf16.gmra.mrb[0].mxu0 %v705
      %v787 = vpop.f32.mrb[0].mxu0
      %v788 = vadd.f32 %v675, %v787
      %v789 = vpop.f32.mrb[0].mxu0
      %v790 = vpop.f32.mrb[0].mxu0
      %v791 = vadd.f32 %v675, %v790
      %v792 = vpop.f32.mrb[0].mxu0
      %793 = vmatprep.mubr.bf16.mxu0 0
      %794 = vmatmul.mubr.bf16.gmra.mrb[0].mxu0 %v708
      %v795 = vpop.f32.mrb[0].mxu0
      %v796 = vadd.f32 %v675, %v795
      %v797 = vpop.f32.mrb[0].mxu0
      %v798 = vpop.f32.mrb[0].mxu0
      %v799 = vadd.f32 %v675, %v798
      %v800 = vpop.f32.mrb[0].mxu0
      %801 = vmatprep.mubr.bf16.mxu0 0
      %802 = vmatmul.mubr.bf16.gmra.mrb[0].mxu0 %v711
      %v803 = vpop.f32.mrb[0].mxu0
      %v804 = vadd.f32 %v675, %v803
      %v805 = vpop.f32.mrb[0].mxu0
      %v806 = vpop.f32.mrb[0].mxu0
      %v807 = vadd.f32 %v675, %v806
      %v808 = vpop.f32.mrb[0].mxu0
      %809 = vdwg.mxu0
      %v810 = vmax.f32 %v748, 0.0
      %v811 = vmax.f32 %v751, 0.0
      %v812 = vmax.f32 %v756, 0.0
      %v813 = vmax.f32 %v759, 0.0
      %v814 = vmax.f32 %v764, 0.0
      %v815 = vmax.f32 %v767, 0.0
      %v816 = vmax.f32 %v772, 0.0
      %v817 = vmax.f32 %v775, 0.0
      %v818 = vmax.f32 %v780, 0.0
      %v819 = vmax.f32 %v783, 0.0
      %v820 = vmax.f32 %v788, 0.0
      %v821 = vmax.f32 %v791, 0.0
      %v822 = vmax.f32 %v796, 0.0
      %v823 = vmax.f32 %v799, 0.0
      %v824 = vmax.f32 %v804, 0.0
      %v825 = vmax.f32 %v807, 0.0
      %v826 = vpack.c.bf16 %v811, %v810
      %v827 = vpack.c.bf16 %v813, %v812
      %v828 = vpack.c.bf16 %v815, %v814
      %v829 = vpack.c.bf16 %v817, %v816
      %v830 = vpack.c.bf16 %v819, %v818
      %v831 = vpack.c.bf16 %v821, %v820
      %v832 = vpack.c.bf16 %v823, %v822
      %v833 = vpack.c.bf16 %v825, %v824
      %v834 = vld [vmem:[%s7] sm:$0xf]
      %v835 = vld [vmem:[%s7 + $0x4] sm:$0xf]
      %v836 = vld [vmem:[%s7 + $0x8] sm:$0xf]
      %v837 = vld [vmem:[%s7 + $0xc] sm:$0xf]
      %v838 = vld [vmem:[%s7 + $0x10] sm:$0xf]
      %v839 = vld [vmem:[%s7 + $0x14] sm:$0xf]
      %v840 = vld [vmem:[%s7 + $0x18] sm:$0xf]
      %v841 = vld [vmem:[%s7 + $0x1c] sm:$0xf]
      %v842 = vld [vmem:[%s8] sm:$0x1]
      %v844 = vlaneseq
      %v845 = vshrl.u32 %v844, 7
      %v846 = vsub.s32 0, %v845
      %v847 = vrot.slane %v842, %v846
      %v857 = vunpack.c.l.b16 %v834
      %v858 = vunpack.c.l.b16 %v835
      %v859 = vunpack.c.l.b16 %v836
      %v860 = vunpack.c.l.b16 %v837
      %v861 = vunpack.c.l.b16 %v838
      %v862 = vunpack.c.l.b16 %v839
      %v863 = vunpack.c.l.b16 %v840
      %v864 = vunpack.c.l.b16 %v841
      %v865 = vpack.c.b16 %v858, %v857
      %v866 = vpack.c.b16 %v860, %v859
      %v867 = vpack.c.b16 %v862, %v861
      %v868 = vpack.c.b16 %v864, %v863
      %vm873 = vcmask 523264
      %v875 = vsel %vm873, %v826, 0
      %v878 = vsel %vm873, %v827, 0
      %v881 = vsel %vm873, %v828, 0
      %v884 = vsel %vm873, %v829, 0
      %v887 = vsel %vm873, %v830, 0
      %v890 = vsel %vm873, %v831, 0
      %v893 = vsel %vm873, %v832, 0
      %v896 = vsel %vm873, %v833, 0
      %898 = vmatprep.subr.bf16.mxu0 0
      %899 = vmatpush1.bf16.msra.mxu0 %v865
      %900 = vmatprep.subr.bf16.mxu0 0
      %901 = vmatpush1.bf16.msra.mxu0 %v866
      %902 = vmatprep.subr.bf16.mxu0 0
      %903 = vmatpush1.bf16.msra.mxu0 %v867
      %904 = vmatprep.subr.bf16.mxu0 0
      %905 = vmatpush1.bf16.msra.mxu0 %v868
      %906 = vmatprep.subr.bf16.mxu0 0
      %907 = vmatpush1.bf16.msra.mxu0 0
      %908 = vmatprep.subr.bf16.mxu0 0
      %909 = vmatpush1.bf16.msra.mxu0 0
      %910 = vmatprep.subr.bf16.mxu0 0
      %911 = vmatpush1.bf16.msra.mxu0 0
      %912 = vmatprep.subr.bf16.mxu0 0
      %913 = vmatpush1.bf16.msra.mxu0 0
      %914 = vmatprep.subr.bf16.mxu0 0
      %915 = vmatpush1.bf16.msra.mxu0 0
      %916 = vmatprep.subr.bf16.mxu0 0
      %917 = vmatpush1.bf16.msra.mxu0 0
      %918 = vmatprep.subr.bf16.mxu0 0
      %919 = vmatpush1.bf16.msra.mxu0 0
      %920 = vmatprep.subr.bf16.mxu0 0
      %921 = vmatpush1.bf16.msra.mxu0 0
      %922 = vmatprep.subr.bf16.mxu0 0
      %923 = vmatpush1.bf16.msra.mxu0 0
      %924 = vmatprep.subr.bf16.mxu0 0
      %925 = vmatpush1.bf16.msra.mxu0 0
      %926 = vmatprep.subr.bf16.mxu0 0
      %927 = vmatpush1.bf16.msra.mxu0 0
      %928 = vmatprep.subr.bf16.mxu0 0
      %929 = vmatpush1.bf16.msra.mxu0 0
      %930 = vmatprep.mubr.bf16.mxu0 0
      %931 = vmatmul.mubr.bf16.gmra.mrb[0].mxu0 %v875
      %v932 = vpop.f32.mrb[0].mxu0
      %v933 = vadd.f32 %v847, %v932
      %v934 = vpop.f32.mrb[0].mxu0
      %v935 = vpop.f32.mrb[0].mxu0
      %v936 = vadd.f32 %v847, %v935
      %v937 = vpop.f32.mrb[0].mxu0
      %938 = vmatprep.mubr.bf16.mxu0 0
      %939 = vmatmul.mubr.bf16.gmra.mrb[0].mxu0 %v878
      %v940 = vpop.f32.mrb[0].mxu0
      %v941 = vadd.f32 %v847, %v940
      %v942 = vpop.f32.mrb[0].mxu0
      %v943 = vpop.f32.mrb[0].mxu0
      %v944 = vadd.f32 %v847, %v943
      %v945 = vpop.f32.mrb[0].mxu0
      %946 = vmatprep.mubr.bf16.mxu0 0
      %947 = vmatmul.mubr.bf16.gmra.mrb[0].mxu0 %v881
      %v948 = vpop.f32.mrb[0].mxu0
      %v949 = vadd.f32 %v847, %v948
      %v950 = vpop.f32.mrb[0].mxu0
      %v951 = vpop.f32.mrb[0].mxu0
      %v952 = vadd.f32 %v847, %v951
      %v953 = vpop.f32.mrb[0].mxu0
      %954 = vmatprep.mubr.bf16.mxu0 0
      %955 = vmatmul.mubr.bf16.gmra.mrb[0].mxu0 %v884
      %v956 = vpop.f32.mrb[0].mxu0
      %v957 = vadd.f32 %v847, %v956
      %v958 = vpop.f32.mrb[0].mxu0
      %v959 = vpop.f32.mrb[0].mxu0
      %v960 = vadd.f32 %v847, %v959
      %v961 = vpop.f32.mrb[0].mxu0
      %962 = vmatprep.mubr.bf16.mxu0 0
      %963 = vmatmul.mubr.bf16.gmra.mrb[0].mxu0 %v887
      %v964 = vpop.f32.mrb[0].mxu0
      %v965 = vadd.f32 %v847, %v964
      %v966 = vpop.f32.mrb[0].mxu0
      %v967 = vpop.f32.mrb[0].mxu0
      %v968 = vadd.f32 %v847, %v967
      %v969 = vpop.f32.mrb[0].mxu0
      %970 = vmatprep.mubr.bf16.mxu0 0
      %971 = vmatmul.mubr.bf16.gmra.mrb[0].mxu0 %v890
      %v972 = vpop.f32.mrb[0].mxu0
      %v973 = vadd.f32 %v847, %v972
      %v974 = vpop.f32.mrb[0].mxu0
      %v975 = vpop.f32.mrb[0].mxu0
      %v976 = vadd.f32 %v847, %v975
      %v977 = vpop.f32.mrb[0].mxu0
      %978 = vmatprep.mubr.bf16.mxu0 0
      %979 = vmatmul.mubr.bf16.gmra.mrb[0].mxu0 %v893
      %v980 = vpop.f32.mrb[0].mxu0
      %v981 = vadd.f32 %v847, %v980
      %v982 = vpop.f32.mrb[0].mxu0
      %v983 = vpop.f32.mrb[0].mxu0
      %v984 = vadd.f32 %v847, %v983
      %v985 = vpop.f32.mrb[0].mxu0
      %986 = vmatprep.mubr.bf16.mxu0 0
      %987 = vmatmul.mubr.bf16.gmra.mrb[0].mxu0 %v896
      %v988 = vpop.f32.mrb[0].mxu0
      %v989 = vadd.f32 %v847, %v988
      %v990 = vpop.f32.mrb[0].mxu0
      %v991 = vpop.f32.mrb[0].mxu0
      %v992 = vadd.f32 %v847, %v991
      %v993 = vpop.f32.mrb[0].mxu0
      %994 = vdwg.mxu0
      %995 = vst.msk [vmem:[%s379] sm:$0xff] %vm536, %v933
      %996 = vst.msk [vmem:[%s379 + $0x8] sm:$0xff] %vm536, %v936
      %997 = vst.msk [vmem:[%s379 + $0x10] sm:$0xff] %vm536, %v941
      %998 = vst.msk [vmem:[%s379 + $0x18] sm:$0xff] %vm536, %v944
      %999 = vst.msk [vmem:[%s379 + $0x20] sm:$0xff] %vm536, %v949
      %1000 = vst.msk [vmem:[%s379 + $0x28] sm:$0xff] %vm536, %v952
      %1001 = vst.msk [vmem:[%s379 + $0x30] sm:$0xff] %vm536, %v957
      %1002 = vst.msk [vmem:[%s379 + $0x38] sm:$0xff] %vm536, %v960
      %1003 = vst.msk [vmem:[%s379 + $0x40] sm:$0xff] %vm536, %v965
      %1004 = vst.msk [vmem:[%s379 + $0x48] sm:$0xff] %vm536, %v968
      %1005 = vst.msk [vmem:[%s379 + $0x50] sm:$0xff] %vm536, %v973
      %1006 = vst.msk [vmem:[%s379 + $0x58] sm:$0xff] %vm536, %v976
      %1007 = vst.msk [vmem:[%s379 + $0x60] sm:$0xff] %vm536, %v981
      %1008 = vst.msk [vmem:[%s379 + $0x68] sm:$0xff] %vm536, %v984
      %1009 = vst.msk [vmem:[%s379 + $0x70] sm:$0xff] %vm536, %v989
      %1010 = vst.msk [vmem:[%s379 + $0x78] sm:$0xff] %vm536, %v992
      %s1011 = smul.u32 16, %s21
      %p1012 = scmp.lt.s32.totalorder %s1011, 31
      %s1013 = scalar_select %p1012, %s1011, 31
      %s1014 = smul.addr %s1013, 8
      %s1015 = scalar_lea.vmem %s9, %s1014
      // Predicated region
      $region57: #{tpu_custom_call.1} parent=55 // pred_check
        %p1016 = pneg %p243
      $region58: #{tpu_custom_call.1} parent=55 // pred_check_branch
        %1018 = sbr.rel (%p1016) target = $region60
      $region59: #{tpu_custom_call.1} parent=55 // pred_region
        %s1019 = smul.u32 16, %s21
      $region60: #{tpu_custom_call.1} parent=55 // pred_fallthru
        _
    $region56: #{tpu_custom_call.1} parent=5 // pred_fallthru
      _
    %p1020 = scmp.le.s32.totalorder 2, %s16
    // Predicated region
    $region61: #{tpu_custom_call.1} parent=5 // pred_check
      %p1021 = pneg %p1020
    $region62: #{tpu_custom_call.1} parent=5 // pred_check_branch
      %1023 = sbr.rel (%p1021) target = $region64
    $region63: #{tpu_custom_call.1} parent=5 // pred_region
      %s1024 = ssub.s32 %s16, 2
      // Predicated region
      $region65: #{tpu_custom_call.1} parent=63 // pred_check
        %p1025 = pneg %p249
      $region66: #{tpu_custom_call.1} parent=63 // pred_check_branch
        %1027 = sbr.rel (%p1025) target = $region68
      $region67: #{tpu_custom_call.1} parent=63 // pred_region
        %s1028 = smul.u32 16, %s22
        %p1029 = scmp.lt.s32.totalorder %s1028, 31
        %s1030 = scalar_select %p1029, %s1028, 31
        %s1031 = smul.addr %s1030, 8
        %s1032 = scalar_lea.vmem %s9, %s1031
      $region68: #{tpu_custom_call.1} parent=63 // pred_fallthru
        _
    $region64: #{tpu_custom_call.1} parent=5 // pred_fallthru
      _
  $region6: #{tpu_custom_call.1} parent=0 // loop_footer
    %s20 = sadd.s32 1, %s16
  $region7: #{tpu_custom_call.1} parent=0 // loop_footer_branch
    %15 = sbr.rel target = $region3
  $region8: #{tpu_custom_call.1} parent=0 // loop_exit
    _

</llo_original>
